<compile_context>
chip_gen: v7x
topology: tpu7x:2x2x1
jax: 0.10.0
libtpu: 0.0.40
codegen_flags: <defaults>
</compile_context>

<pallas_src>
import jax
import jax.numpy as jnp
from jax.experimental import pallas as pl
from jax.experimental.pallas import tpu as pltpu

TILE_B_MAX = 2048  # rows per grid step (upper bound); multiple of 8.


def _round_up(n, m):
    return ((n + m - 1) // m) * m


def sim_net_kernel(x_ref, w1_ref, b1_ref, w2_ref, b2_ref, w3_ref, b3_ref, o_ref):
    # Layer 1: Linear(30 -> 40) + ReLU
    h = jnp.dot(x_ref[...], w1_ref[...], preferred_element_type=jnp.float32)
    h = jnp.maximum(h + b1_ref[...], 0.0)
    # Layer 2: Linear(40 -> 50) + ReLU
    h = jnp.dot(h, w2_ref[...], preferred_element_type=jnp.float32)
    h = jnp.maximum(h + b2_ref[...], 0.0)
    # Layer 3: Linear(50 -> 10) + ReLU
    h = jnp.dot(h, w3_ref[...], preferred_element_type=jnp.float32)
    h = jnp.maximum(h + b3_ref[...], 0.0)
    o_ref[...] = h.astype(o_ref.dtype)


def prepare_params(params):
    """One-time prep: transpose weights to (in, out) and reshape biases to (1, out)."""
    return {
        "w1": params["w1"].T,                 # (30, 40)
        "b1": params["b1"].reshape(1, -1),    # (1, 40)
        "w2": params["w2"].T,                 # (40, 50)
        "b2": params["b2"].reshape(1, -1),    # (1, 50)
        "w3": params["w3"].T,                 # (50, 10)
        "b3": params["b3"].reshape(1, -1),    # (1, 10)
    }


def sim_net_forward(x, prepped, tile_b_max=TILE_B_MAX):
    """x: (B, 30) float32. prepped: output of prepare_params()."""
    B = x.shape[0]
    # Adaptive tile: at most one partially-masked block of padding, no
    # wrapper-side jnp.pad / slice copies.
    tile_b = min(_round_up(B, 8), tile_b_max)
    num_tiles = -(-B // tile_b)  # ceil div (static Python int)

    # Advisory cost estimate for XLA's scheduler (HBM-bound kernel).
    flops = 2 * B * (30 * 40 + 40 * 50 + 50 * 10)
    bytes_accessed = 4 * (
        B * (30 + 10) + 30 * 40 + 40 + 40 * 50 + 50 + 50 * 10 + 10
    )

    out = pl.pallas_call(
        sim_net_kernel,
        out_shape=jax.ShapeDtypeStruct((B, 10), jnp.float32),
        grid=(num_tiles,),
        in_specs=[
            # x tile: streams per grid step (double-buffered automatically);
            # the final partial block (if any) is masked by Pallas.
            pl.BlockSpec((tile_b, 30), lambda i: (i, 0)),
            # weights/biases: full arrays, constant index_map -> VMEM-resident
            # across all grid steps (no re-DMA).
            pl.BlockSpec((30, 40), lambda i: (0, 0)),
            pl.BlockSpec((1, 40), lambda i: (0, 0)),
            pl.BlockSpec((40, 50), lambda i: (0, 0)),
            pl.BlockSpec((1, 50), lambda i: (0, 0)),
            pl.BlockSpec((50, 10), lambda i: (0, 0)),
            pl.BlockSpec((1, 10), lambda i: (0, 0)),
        ],
        out_specs=pl.BlockSpec((tile_b, 10), lambda i: (i, 0)),
        compiler_params=pltpu.CompilerParams(
            dimension_semantics=("parallel",),
        ),
        cost_estimate=pl.CostEstimate(
            flops=flops, transcendentals=0, bytes_accessed=bytes_accessed
        ),
    )(x, prepped["w1"], prepped["b1"], prepped["w2"], prepped["b2"],
      prepped["w3"], prepped["b3"])
    return out


def init_params(key):
    """Deterministic parameter init mirroring the PyTorch module's shapes.

    l1.weight is explicitly set to randn(40, 30) in the module; l2/l3 keep
    the default nn.Linear init (uniform in +/- 1/sqrt(fan_in))."""
    k1, k2, k3, k4, k5, k6 = jax.random.split(key, 6)
    params = {}
    params["w1"] = jax.random.normal(k1, (40, 30), jnp.float32)
    bound1 = 1.0 / jnp.sqrt(30.0)
    params["b1"] = jax.random.uniform(k2, (40,), jnp.float32, -bound1, bound1)
    bound2 = 1.0 / jnp.sqrt(40.0)
    params["w2"] = jax.random.uniform(k3, (50, 40), jnp.float32, -bound2, bound2)
    params["b2"] = jax.random.uniform(k4, (50,), jnp.float32, -bound2, bound2)
    bound3 = 1.0 / jnp.sqrt(50.0)
    params["w3"] = jax.random.uniform(k5, (10, 50), jnp.float32, -bound3, bound3)
    params["b3"] = jax.random.uniform(k6, (10,), jnp.float32, -bound3, bound3)
    return params


if __name__ == "__main__":
    key = jax.random.PRNGKey(0)
    pkey, xkey = jax.random.split(key)
    params = init_params(pkey)
    prepped = prepare_params(params)   # one-time: transposes / reshapes hoisted here

    # Small ragged batch (not a multiple of 8 or of any tile size).
    B = 300
    x = jax.random.normal(xkey, (B, 30), jnp.float32)

    # Pure-JAX reference (original (out, in) weight layout).
    h = jnp.maximum(x @ params["w1"].T + params["b1"], 0.0)
    h = jnp.maximum(h @ params["w2"].T + params["b2"], 0.0)
    ref = jnp.maximum(h @ params["w3"].T + params["b3"], 0.0)

    # 1) Default adaptive tile: single (masked) block covering the whole batch.
    fwd = jax.jit(sim_net_forward)
    out = jax.block_until_ready(fwd(x, prepped))
    assert out.shape == (B, 10)
    assert jnp.allclose(out, ref, atol=1e-5, rtol=1e-5)

    # 2) Forced small tile: exercises grid > 1 with a ragged final block
    #    (300 = 2 * 128 + 44), still no wrapper-side padding/slicing.
    fwd_small = jax.jit(lambda xx, pp: sim_net_forward(xx, pp, tile_b_max=128))
    out2 = jax.block_until_ready(fwd_small(x, prepped))
    assert out2.shape == (B, 10)
    assert jnp.allclose(out2, ref, atol=1e-5, rtol=1e-5)

    print("KERNEL_OK")
</pallas_src>

<mosaic_0001>
module attributes {stable_mosaic.version = 11 : i64} {
  func.func @sim_net_kernel(%arg0: i32, %arg1: memref<304x30xf32, #tpu.memory_space<vmem>>, %arg2: memref<30x40xf32, #tpu.memory_space<vmem>>, %arg3: memref<1x40xf32, #tpu.memory_space<vmem>>, %arg4: memref<40x50xf32, #tpu.memory_space<vmem>>, %arg5: memref<1x50xf32, #tpu.memory_space<vmem>>, %arg6: memref<50x10xf32, #tpu.memory_space<vmem>>, %arg7: memref<1x10xf32, #tpu.memory_space<vmem>>, %arg8: memref<304x10xf32, #tpu.memory_space<vmem>>) attributes {dimension_semantics = [#tpu.dimension_semantics<parallel>], iteration_bounds = array<i64: 1>, scalar_prefetch = 0 : i64, scratch_operands = 0 : i64, tpu.core_type = #tpu.core_type<tc>, window_params = [{transform_indices = @transform_0, window_bounds = array<i64: 304, 30>}, {pipeline_mode = #tpu.pipeline_mode<synchronous>, transform_indices = @transform_1, window_bounds = array<i64: 30, 40>}, {pipeline_mode = #tpu.pipeline_mode<synchronous>, transform_indices = @transform_2, window_bounds = array<i64: 1, 40>}, {pipeline_mode = #tpu.pipeline_mode<synchronous>, transform_indices = @transform_3, window_bounds = array<i64: 40, 50>}, {pipeline_mode = #tpu.pipeline_mode<synchronous>, transform_indices = @transform_4, window_bounds = array<i64: 1, 50>}, {pipeline_mode = #tpu.pipeline_mode<synchronous>, transform_indices = @transform_5, window_bounds = array<i64: 50, 10>}, {pipeline_mode = #tpu.pipeline_mode<synchronous>, transform_indices = @transform_6, window_bounds = array<i64: 1, 10>}, {transform_indices = @transform_7, window_bounds = array<i64: 304, 10>}]} {
    %c0 = arith.constant 0 : index
    %c0_0 = arith.constant 0 : index
    %0 = vector.load %arg1[%c0, %c0_0] : memref<304x30xf32, #tpu.memory_space<vmem>>, vector<304x30xf32>
    %c0_1 = arith.constant 0 : index
    %c0_2 = arith.constant 0 : index
    %1 = vector.load %arg2[%c0_1, %c0_2] : memref<30x40xf32, #tpu.memory_space<vmem>>, vector<30x40xf32>
    %cst = arith.constant dense<0.000000e+00> : vector<304x40xf32>
    %2 = tpu.matmul %0, %1, %cst {dimension_numbers = #tpu.dot_dimension_numbers<[1], [0], [0], [1], [0, 0, 1, 1], [], []>} : vector<304x30xf32>, vector<30x40xf32>, vector<304x40xf32> -> vector<304x40xf32>
    %c0_3 = arith.constant 0 : index
    %c0_4 = arith.constant 0 : index
    %3 = vector.load %arg3[%c0_3, %c0_4] : memref<1x40xf32, #tpu.memory_space<vmem>>, vector<1x40xf32>
    %4 = vector.broadcast %3 : vector<1x40xf32> to vector<304x40xf32>
    %5 = arith.addf %2, %4 : vector<304x40xf32>
    %cst_5 = arith.constant 0.000000e+00 : f32
    %6 = vector.broadcast %cst_5 : f32 to vector<304x40xf32>
    %7 = arith.maximumf %5, %6 : vector<304x40xf32>
    %c0_6 = arith.constant 0 : index
    %c0_7 = arith.constant 0 : index
    %8 = vector.load %arg4[%c0_6, %c0_7] : memref<40x50xf32, #tpu.memory_space<vmem>>, vector<40x50xf32>
    %cst_8 = arith.constant dense<0.000000e+00> : vector<304x50xf32>
    %9 = tpu.matmul %7, %8, %cst_8 {dimension_numbers = #tpu.dot_dimension_numbers<[1], [0], [0], [1], [0, 0, 1, 1], [], []>} : vector<304x40xf32>, vector<40x50xf32>, vector<304x50xf32> -> vector<304x50xf32>
    %c0_9 = arith.constant 0 : index
    %c0_10 = arith.constant 0 : index
    %10 = vector.load %arg5[%c0_9, %c0_10] : memref<1x50xf32, #tpu.memory_space<vmem>>, vector<1x50xf32>
    %11 = vector.broadcast %10 : vector<1x50xf32> to vector<304x50xf32>
    %12 = arith.addf %9, %11 : vector<304x50xf32>
    %cst_11 = arith.constant 0.000000e+00 : f32
    %13 = vector.broadcast %cst_11 : f32 to vector<304x50xf32>
    %14 = arith.maximumf %12, %13 : vector<304x50xf32>
    %c0_12 = arith.constant 0 : index
    %c0_13 = arith.constant 0 : index
    %15 = vector.load %arg6[%c0_12, %c0_13] : memref<50x10xf32, #tpu.memory_space<vmem>>, vector<50x10xf32>
    %cst_14 = arith.constant dense<0.000000e+00> : vector<304x10xf32>
    %16 = tpu.matmul %14, %15, %cst_14 {dimension_numbers = #tpu.dot_dimension_numbers<[1], [0], [0], [1], [0, 0, 1, 1], [], []>} : vector<304x50xf32>, vector<50x10xf32>, vector<304x10xf32> -> vector<304x10xf32>
    %c0_15 = arith.constant 0 : index
    %c0_16 = arith.constant 0 : index
    %17 = vector.load %arg7[%c0_15, %c0_16] : memref<1x10xf32, #tpu.memory_space<vmem>>, vector<1x10xf32>
    %18 = vector.broadcast %17 : vector<1x10xf32> to vector<304x10xf32>
    %19 = arith.addf %16, %18 : vector<304x10xf32>
    %cst_17 = arith.constant 0.000000e+00 : f32
    %20 = vector.broadcast %cst_17 : f32 to vector<304x10xf32>
    %21 = arith.maximumf %19, %20 : vector<304x10xf32>
    %c0_18 = arith.constant 0 : index
    %c0_19 = arith.constant 0 : index
    %22 = vector.load %arg8[%c0_18, %c0_19] : memref<304x10xf32, #tpu.memory_space<vmem>>, vector<304x10xf32>
    tpu.vector_store %arg8[%c0_18, %c0_19], %21 {strides = array<i32>} : memref<304x10xf32, #tpu.memory_space<vmem>>, vector<304x10xf32>,
    return
  }
  func.func @transform_0(%arg0: i32) -> (i32, i32) {
    %c0_i32 = arith.constant 0 : i32
    %c0_i32_0 = arith.constant 0 : i32
    return %arg0, %c0_i32 : i32, i32
  }
  func.func @transform_1(%arg0: i32) -> (i32, i32) {
    %c0_i32 = arith.constant 0 : i32
    %c0_i32_0 = arith.constant 0 : i32
    %c0_i32_1 = arith.constant 0 : i32
    return %c0_i32, %c0_i32_0 : i32, i32
  }
  func.func @transform_2(%arg0: i32) -> (i32, i32) {
    %c0_i32 = arith.constant 0 : i32
    %c0_i32_0 = arith.constant 0 : i32
    %c0_i32_1 = arith.constant 0 : i32
    return %c0_i32, %c0_i32_0 : i32, i32
  }
  func.func @transform_3(%arg0: i32) -> (i32, i32) {
    %c0_i32 = arith.constant 0 : i32
    %c0_i32_0 = arith.constant 0 : i32
    %c0_i32_1 = arith.constant 0 : i32
    return %c0_i32, %c0_i32_0 : i32, i32
  }
  func.func @transform_4(%arg0: i32) -> (i32, i32) {
    %c0_i32 = arith.constant 0 : i32
    %c0_i32_0 = arith.constant 0 : i32
    %c0_i32_1 = arith.constant 0 : i32
    return %c0_i32, %c0_i32_0 : i32, i32
  }
  func.func @transform_5(%arg0: i32) -> (i32, i32) {
    %c0_i32 = arith.constant 0 : i32
    %c0_i32_0 = arith.constant 0 : i32
    %c0_i32_1 = arith.constant 0 : i32
    return %c0_i32, %c0_i32_0 : i32, i32
  }
  func.func @transform_6(%arg0: i32) -> (i32, i32) {
    %c0_i32 = arith.constant 0 : i32
    %c0_i32_0 = arith.constant 0 : i32
    %c0_i32_1 = arith.constant 0 : i32
    return %c0_i32, %c0_i32_0 : i32, i32
  }
  func.func @transform_7(%arg0: i32) -> (i32, i32) {
    %c0_i32 = arith.constant 0 : i32
    %c0_i32_0 = arith.constant 0 : i32
    return %arg0, %c0_i32 : i32, i32
  }
}

</mosaic_0001>

<llo_original>
// kernel: sim_net_forward.1
$region0: #{sim_net_forward.1}
  #allocation0 [shape = 'u32[]', space=smem, size = 0x4, offset = 0x4, fixed_abs, tag = 'smem constant byte address 0x4 - core index']
  #allocation1 [shape = 'u32[144,128]{1,0:T(1,128)}', space=vmem, size = 0x12000, scoped, tag = 'internal scratch']
  %s0 = inlined_call_operand.vmem [shape: f32[300,30], index: 0, kind: input, shape index: {}]
  %s1 = inlined_call_operand.vmem [shape: f32[30,40], index: 1, kind: input, shape index: {}]
  %s2 = inlined_call_operand.vmem [shape: f32[1,40], index: 2, kind: input, shape index: {}]
  %s3 = inlined_call_operand.vmem [shape: f32[40,50], index: 3, kind: input, shape index: {}]
  %s4 = inlined_call_operand.vmem [shape: f32[1,50], index: 4, kind: input, shape index: {}]
  %s5 = inlined_call_operand.vmem [shape: f32[50,10], index: 5, kind: input, shape index: {}]
  %s6 = inlined_call_operand.vmem [shape: f32[1,10], index: 6, kind: input, shape index: {}]
  %s7 = inlined_call_operand.vmem [shape: f32[300,10], index: 7, kind: output, shape index: {}]
  %s8 = sld [smem:[#allocation0]]
  $region38: #{sim_net_forward.1} parent=0
    _
  %s10 = ssub.s32 1, %s8
  %s11 = scalar_select 0, %s10, %s8
  // Predicated region
  $region2: #{sim_net_forward.1} parent=0 // pred_check
    _
  $region3: #{sim_net_forward.1} parent=0 // pred_check_branch
    %13 = sbr.rel (0) target = $region5
  $region4: #{sim_net_forward.1} parent=0 // pred_region
    _
  $region5: #{sim_net_forward.1} parent=0 // pred_fallthru
    _
  // Predicated region
  $region6: #{sim_net_forward.1} parent=0 // pred_check
    _
  $region7: #{sim_net_forward.1} parent=0 // pred_check_branch
    %15 = sbr.rel (0) target = $region9
  $region8: #{sim_net_forward.1} parent=0 // pred_region
    _
  $region9: #{sim_net_forward.1} parent=0 // pred_fallthru
    _
  // Predicated region
  $region10: #{sim_net_forward.1} parent=0 // pred_check
    _
  $region11: #{sim_net_forward.1} parent=0 // pred_check_branch
    %17 = sbr.rel (0) target = $region13
  $region12: #{sim_net_forward.1} parent=0 // pred_region
    _
  $region13: #{sim_net_forward.1} parent=0 // pred_fallthru
    _
  // Predicated region
  $region14: #{sim_net_forward.1} parent=0 // pred_check
    _
  $region15: #{sim_net_forward.1} parent=0 // pred_check_branch
    %19 = sbr.rel (0) target = $region17
  $region16: #{sim_net_forward.1} parent=0 // pred_region
    _
  $region17: #{sim_net_forward.1} parent=0 // pred_fallthru
    _
  // Predicated region
  $region18: #{sim_net_forward.1} parent=0 // pred_check
    _
  $region19: #{sim_net_forward.1} parent=0 // pred_check_branch
    %21 = sbr.rel (0) target = $region21
  $region20: #{sim_net_forward.1} parent=0 // pred_region
    _
  $region21: #{sim_net_forward.1} parent=0 // pred_fallthru
    _
  // Predicated region
  $region22: #{sim_net_forward.1} parent=0 // pred_check
    _
  $region23: #{sim_net_forward.1} parent=0 // pred_check_branch
    %23 = sbr.rel (0) target = $region25
  $region24: #{sim_net_forward.1} parent=0 // pred_region
    _
  $region25: #{sim_net_forward.1} parent=0 // pred_fallthru
    _
  // Predicated region
  $region26: #{sim_net_forward.1} parent=0 // pred_check
    _
  $region27: #{sim_net_forward.1} parent=0 // pred_check_branch
    %25 = sbr.rel (0) target = $region29
  $region28: #{sim_net_forward.1} parent=0 // pred_region
    _
  $region29: #{sim_net_forward.1} parent=0 // pred_fallthru
    _
  %v26 = vld [vmem:[%s0] sm:$0xff]
  %v27 = vld [vmem:[%s0 + $0x8] sm:$0xff]
  %v28 = vld [vmem:[%s0 + $0x10] sm:$0xff]
  %v29 = vld [vmem:[%s0 + $0x18] sm:$0xff]
  %v30 = vld [vmem:[%s0 + $0x20] sm:$0xff]
  %v31 = vld [vmem:[%s0 + $0x28] sm:$0xff]
  %v32 = vld [vmem:[%s0 + $0x30] sm:$0xff]
  %v33 = vld [vmem:[%s0 + $0x38] sm:$0xff]
  %v34 = vld [vmem:[%s0 + $0x40] sm:$0xff]
  %v35 = vld [vmem:[%s0 + $0x48] sm:$0xff]
  %v36 = vld [vmem:[%s0 + $0x50] sm:$0xff]
  %v37 = vld [vmem:[%s0 + $0x58] sm:$0xff]
  %v38 = vld [vmem:[%s0 + $0x60] sm:$0xff]
  %v39 = vld [vmem:[%s0 + $0x68] sm:$0xff]
  %v40 = vld [vmem:[%s0 + $0x70] sm:$0xff]
  %v41 = vld [vmem:[%s0 + $0x78] sm:$0xff]
  %v42 = vld [vmem:[%s0 + $0x80] sm:$0xff]
  %v43 = vld [vmem:[%s0 + $0x88] sm:$0xff]
  %v44 = vld [vmem:[%s0 + $0x90] sm:$0xff]
  %v45 = vld [vmem:[%s0 + $0x98] sm:$0xff]
  %v46 = vld [vmem:[%s0 + $0xa0] sm:$0xff]
  %v47 = vld [vmem:[%s0 + $0xa8] sm:$0xff]
  %v48 = vld [vmem:[%s0 + $0xb0] sm:$0xff]
  %v49 = vld [vmem:[%s0 + $0xb8] sm:$0xff]
  %v50 = vld [vmem:[%s0 + $0xc0] sm:$0xff]
  %v51 = vld [vmem:[%s0 + $0xc8] sm:$0xff]
  %v52 = vld [vmem:[%s0 + $0xd0] sm:$0xff]
  %v53 = vld [vmem:[%s0 + $0xd8] sm:$0xff]
  %v54 = vld [vmem:[%s0 + $0xe0] sm:$0xff]
  %v55 = vld [vmem:[%s0 + $0xe8] sm:$0xff]
  %v56 = vld [vmem:[%s0 + $0xf0] sm:$0xff]
  %v57 = vld [vmem:[%s0 + $0xf8] sm:$0xff]
  %v58 = vld [vmem:[%s0 + $0x100] sm:$0xff]
  %v59 = vld [vmem:[%s0 + $0x108] sm:$0xff]
  %v60 = vld [vmem:[%s0 + $0x110] sm:$0xff]
  %v61 = vld [vmem:[%s0 + $0x118] sm:$0xff]
  %v62 = vld [vmem:[%s0 + $0x120] sm:$0xff]
  %v63 = vld [vmem:[%s0 + $0x128] sm:$0xff]
  %v64 = vld [vmem:[%s1] sm:$0xff]
  %v65 = vld [vmem:[%s1 + $0x8] sm:$0xff]
  %v66 = vld [vmem:[%s1 + $0x10] sm:$0xff]
  %v67 = vld [vmem:[%s1 + $0x18] sm:$0x3f]
  %v68 = vld [vmem:[%s2] sm:$0x1]
  %v70 = vlaneseq
  %v71 = vshrl.u32 %v70, 7
  %v72 = vsub.s32 0, %v71
  %v73 = vrot.slane %v68, %v72
  %vm75 = vcmask 244736
  %v77 = vsel %vm75, %v26, 0
  %v80 = vsel %vm75, %v27, 0
  %v83 = vsel %vm75, %v28, 0
  %v86 = vsel %vm75, %v29, 0
  %v89 = vsel %vm75, %v30, 0
  %v92 = vsel %vm75, %v31, 0
  %v95 = vsel %vm75, %v32, 0
  %v98 = vsel %vm75, %v33, 0
  %v101 = vsel %vm75, %v34, 0
  %v104 = vsel %vm75, %v35, 0
  %v107 = vsel %vm75, %v36, 0
  %v110 = vsel %vm75, %v37, 0
  %v113 = vsel %vm75, %v38, 0
  %v116 = vsel %vm75, %v39, 0
  %v119 = vsel %vm75, %v40, 0
  %v122 = vsel %vm75, %v41, 0
  %v125 = vsel %vm75, %v42, 0
  %v128 = vsel %vm75, %v43, 0
  %v131 = vsel %vm75, %v44, 0
  %v134 = vsel %vm75, %v45, 0
  %v137 = vsel %vm75, %v46, 0
  %v140 = vsel %vm75, %v47, 0
  %v143 = vsel %vm75, %v48, 0
  %v146 = vsel %vm75, %v49, 0
  %v149 = vsel %vm75, %v50, 0
  %v152 = vsel %vm75, %v51, 0
  %v155 = vsel %vm75, %v52, 0
  %v158 = vsel %vm75, %v53, 0
  %v161 = vsel %vm75, %v54, 0
  %v164 = vsel %vm75, %v55, 0
  %v167 = vsel %vm75, %v56, 0
  %v170 = vsel %vm75, %v57, 0
  %v173 = vsel %vm75, %v58, 0
  %v176 = vsel %vm75, %v59, 0
  %v179 = vsel %vm75, %v60, 0
  %v182 = vsel %vm75, %v61, 0
  %v185 = vsel %vm75, %v62, 0
  %v188 = vsel %vm75, %v63, 0
  %vm190 = vcmask 1045504
  %v192 = vsel %vm190, %v67, 0
  %194 = vmatprep.subr.mxu0 0.0
  %195 = vmatpush1.msra.mxu0 %v64
  %196 = vmatprep.subr.mxu0 0.0
  %197 = vmatpush1.msra.mxu0 %v65
  %198 = vmatprep.subr.mxu0 0.0
  %199 = vmatpush1.msra.mxu0 %v66
  %200 = vmatprep.subr.mxu0 0.0
  %201 = vmatpush1.msra.mxu0 %v192
  %202 = vmatprep.subr.mxu0 0.0
  %203 = vmatpush1.msra.mxu0 0.0
  %204 = vmatprep.subr.mxu0 0.0
  %205 = vmatpush1.msra.mxu0 0.0
  %206 = vmatprep.subr.mxu0 0.0
  %207 = vmatpush1.msra.mxu0 0.0
  %208 = vmatprep.subr.mxu0 0.0
  %209 = vmatpush1.msra.mxu0 0.0
  %210 = vmatprep.subr.mxu0 0.0
  %211 = vmatpush1.msra.mxu0 0.0
  %212 = vmatprep.subr.mxu0 0.0
  %213 = vmatpush1.msra.mxu0 0.0
  %214 = vmatprep.subr.mxu0 0.0
  %215 = vmatpush1.msra.mxu0 0.0
  %216 = vmatprep.subr.mxu0 0.0
  %217 = vmatpush1.msra.mxu0 0.0
  %218 = vmatprep.subr.mxu0 0.0
  %219 = vmatpush1.msra.mxu0 0.0
  %220 = vmatprep.subr.mxu0 0.0
  %221 = vmatpush1.msra.mxu0 0.0
  %222 = vmatprep.subr.mxu0 0.0
  %223 = vmatpush1.msra.mxu0 0.0
  %224 = vmatprep.subr.mxu0 0.0
  %225 = vmatpush1.msra.mxu0 0.0
  %226 = vmatprep.subr.mxu0 0.0
  %227 = vmatpush1.msra.mxu0 0.0
  %228 = vmatprep.subr.mxu0 0.0
  %229 = vmatpush1.msra.mxu0 0.0
  %230 = vmatprep.subr.mxu0 0.0
  %231 = vmatpush1.msra.mxu0 0.0
  %232 = vmatprep.subr.mxu0 0.0
  %233 = vmatpush1.msra.mxu0 0.0
  %234 = vmatprep.subr.mxu0 0.0
  %235 = vmatpush1.msra.mxu0 0.0
  %236 = vmatprep.subr.mxu0 0.0
  %237 = vmatpush1.msra.mxu0 0.0
  %238 = vmatprep.subr.mxu0 0.0
  %239 = vmatpush1.msra.mxu0 0.0
  %240 = vmatprep.subr.mxu0 0.0
  %241 = vmatpush1.msra.mxu0 0.0
  %242 = vmatprep.subr.mxu0 0.0
  %243 = vmatpush1.msra.mxu0 0.0
  %244 = vmatprep.subr.mxu0 0.0
  %245 = vmatpush1.msra.mxu0 0.0
  %246 = vmatprep.subr.mxu0 0.0
  %247 = vmatpush1.msra.mxu0 0.0
  %248 = vmatprep.subr.mxu0 0.0
  %249 = vmatpush1.msra.mxu0 0.0
  %250 = vmatprep.subr.mxu0 0.0
  %251 = vmatpush1.msra.mxu0 0.0
  %252 = vmatprep.subr.mxu0 0.0
  %253 = vmatpush1.msra.mxu0 0.0
  %254 = vmatprep.subr.mxu0 0.0
  %255 = vmatpush1.msra.mxu0 0.0
  %256 = vmatprep.subr.mxu0 0.0
  %257 = vmatpush1.msra.mxu0 0.0
  %258 = vmatprep.mubr.f32.mxu0 0.0
  %259 = vmatmul.mubr.f32.gmra.mrb[0].mxu0 %v77
  %v260 = vpop.f32.mrb[0].mxu0
  %v261 = vadd.f32 %v73, %v260
  %v262 = vpop.f32.mrb[0].mxu0
  %263 = vmatprep.mubr.f32.mxu0 0.0
  %264 = vmatmul.mubr.f32.gmra.mrb[0].mxu0 %v80
  %v265 = vpop.f32.mrb[0].mxu0
  %v266 = vadd.f32 %v73, %v265
  %v267 = vpop.f32.mrb[0].mxu0
  %268 = vmatprep.mubr.f32.mxu0 0.0
  %269 = vmatmul.mubr.f32.gmra.mrb[0].mxu0 %v83
  %v270 = vpop.f32.mrb[0].mxu0
  %v271 = vadd.f32 %v73, %v270
  %v272 = vpop.f32.mrb[0].mxu0
  %273 = vmatprep.mubr.f32.mxu0 0.0
  %274 = vmatmul.mubr.f32.gmra.mrb[0].mxu0 %v86
  %v275 = vpop.f32.mrb[0].mxu0
  %v276 = vadd.f32 %v73, %v275
  %v277 = vpop.f32.mrb[0].mxu0
  %278 = vmatprep.mubr.f32.mxu0 0.0
  %279 = vmatmul.mubr.f32.gmra.mrb[0].mxu0 %v89
  %v280 = vpop.f32.mrb[0].mxu0
  %v281 = vadd.f32 %v73, %v280
  %v282 = vpop.f32.mrb[0].mxu0
  %283 = vmatprep.mubr.f32.mxu0 0.0
  %284 = vmatmul.mubr.f32.gmra.mrb[0].mxu0 %v92
  %v285 = vpop.f32.mrb[0].mxu0
  %v286 = vadd.f32 %v73, %v285
  %v287 = vpop.f32.mrb[0].mxu0
  %288 = vmatprep.mubr.f32.mxu0 0.0
  %289 = vmatmul.mubr.f32.gmra.mrb[0].mxu0 %v95
  %v290 = vpop.f32.mrb[0].mxu0
  %v291 = vadd.f32 %v73, %v290
  %v292 = vpop.f32.mrb[0].mxu0
  %293 = vmatprep.mubr.f32.mxu0 0.0
  %294 = vmatmul.mubr.f32.gmra.mrb[0].mxu0 %v98
  %v295 = vpop.f32.mrb[0].mxu0
  %v296 = vadd.f32 %v73, %v295
  %v297 = vpop.f32.mrb[0].mxu0
  %298 = vmatprep.mubr.f32.mxu0 0.0
  %299 = vmatmul.mubr.f32.gmra.mrb[0].mxu0 %v101
  %v300 = vpop.f32.mrb[0].mxu0
  %v301 = vadd.f32 %v73, %v300
  %v302 = vpop.f32.mrb[0].mxu0
  %303 = vmatprep.mubr.f32.mxu0 0.0
  %304 = vmatmul.mubr.f32.gmra.mrb[0].mxu0 %v104
  %v305 = vpop.f32.mrb[0].mxu0
  %v306 = vadd.f32 %v73, %v305
  %v307 = vpop.f32.mrb[0].mxu0
  %308 = vmatprep.mubr.f32.mxu0 0.0
  %309 = vmatmul.mubr.f32.gmra.mrb[0].mxu0 %v107
  %v310 = vpop.f32.mrb[0].mxu0
  %v311 = vadd.f32 %v73, %v310
  %v312 = vpop.f32.mrb[0].mxu0
  %313 = vmatprep.mubr.f32.mxu0 0.0
  %314 = vmatmul.mubr.f32.gmra.mrb[0].mxu0 %v110
  %v315 = vpop.f32.mrb[0].mxu0
  %v316 = vadd.f32 %v73, %v315
  %v317 = vpop.f32.mrb[0].mxu0
  %318 = vmatprep.mubr.f32.mxu0 0.0
  %319 = vmatmul.mubr.f32.gmra.mrb[0].mxu0 %v113
  %v320 = vpop.f32.mrb[0].mxu0
  %v321 = vadd.f32 %v73, %v320
  %v322 = vpop.f32.mrb[0].mxu0
  %323 = vmatprep.mubr.f32.mxu0 0.0
  %324 = vmatmul.mubr.f32.gmra.mrb[0].mxu0 %v116
  %v325 = vpop.f32.mrb[0].mxu0
  %v326 = vadd.f32 %v73, %v325
  %v327 = vpop.f32.mrb[0].mxu0
  %328 = vmatprep.mubr.f32.mxu0 0.0
  %329 = vmatmul.mubr.f32.gmra.mrb[0].mxu0 %v119
  %v330 = vpop.f32.mrb[0].mxu0
  %v331 = vadd.f32 %v73, %v330
  %v332 = vpop.f32.mrb[0].mxu0
  %333 = vmatprep.mubr.f32.mxu0 0.0
  %334 = vmatmul.mubr.f32.gmra.mrb[0].mxu0 %v122
  %v335 = vpop.f32.mrb[0].mxu0
  %v336 = vadd.f32 %v73, %v335
  %v337 = vpop.f32.mrb[0].mxu0
  %338 = vmatprep.mubr.f32.mxu0 0.0
  %339 = vmatmul.mubr.f32.gmra.mrb[0].mxu0 %v125
  %v340 = vpop.f32.mrb[0].mxu0
  %v341 = vadd.f32 %v73, %v340
  %v342 = vpop.f32.mrb[0].mxu0
  %343 = vmatprep.mubr.f32.mxu0 0.0
  %344 = vmatmul.mubr.f32.gmra.mrb[0].mxu0 %v128
  %v345 = vpop.f32.mrb[0].mxu0
  %v346 = vadd.f32 %v73, %v345
  %v347 = vpop.f32.mrb[0].mxu0
  %348 = vmatprep.mubr.f32.mxu0 0.0
  %349 = vmatmul.mubr.f32.gmra.mrb[0].mxu0 %v131
  %v350 = vpop.f32.mrb[0].mxu0
  %v351 = vadd.f32 %v73, %v350
  %v352 = vpop.f32.mrb[0].mxu0
  %353 = vmatprep.mubr.f32.mxu0 0.0
  %354 = vmatmul.mubr.f32.gmra.mrb[0].mxu0 %v134
  %v355 = vpop.f32.mrb[0].mxu0
  %v356 = vadd.f32 %v73, %v355
  %v357 = vpop.f32.mrb[0].mxu0
  %358 = vmatprep.mubr.f32.mxu0 0.0
  %359 = vmatmul.mubr.f32.gmra.mrb[0].mxu0 %v137
  %v360 = vpop.f32.mrb[0].mxu0
  %v361 = vadd.f32 %v73, %v360
  %v362 = vpop.f32.mrb[0].mxu0
  %363 = vmatprep.mubr.f32.mxu0 0.0
  %364 = vmatmul.mubr.f32.gmra.mrb[0].mxu0 %v140
  %v365 = vpop.f32.mrb[0].mxu0
  %v366 = vadd.f32 %v73, %v365
  %v367 = vpop.f32.mrb[0].mxu0
  %368 = vmatprep.mubr.f32.mxu0 0.0
  %369 = vmatmul.mubr.f32.gmra.mrb[0].mxu0 %v143
  %v370 = vpop.f32.mrb[0].mxu0
  %v371 = vadd.f32 %v73, %v370
  %v372 = vpop.f32.mrb[0].mxu0
  %373 = vmatprep.mubr.f32.mxu0 0.0
  %374 = vmatmul.mubr.f32.gmra.mrb[0].mxu0 %v146
  %v375 = vpop.f32.mrb[0].mxu0
  %v376 = vadd.f32 %v73, %v375
  %v377 = vpop.f32.mrb[0].mxu0
  %378 = vmatprep.mubr.f32.mxu0 0.0
  %379 = vmatmul.mubr.f32.gmra.mrb[0].mxu0 %v149
  %v380 = vpop.f32.mrb[0].mxu0
  %v381 = vadd.f32 %v73, %v380
  %v382 = vpop.f32.mrb[0].mxu0
  %383 = vmatprep.mubr.f32.mxu0 0.0
  %384 = vmatmul.mubr.f32.gmra.mrb[0].mxu0 %v152
  %v385 = vpop.f32.mrb[0].mxu0
  %v386 = vadd.f32 %v73, %v385
  %v387 = vpop.f32.mrb[0].mxu0
  %388 = vmatprep.mubr.f32.mxu0 0.0
  %389 = vmatmul.mubr.f32.gmra.mrb[0].mxu0 %v155
  %v390 = vpop.f32.mrb[0].mxu0
  %v391 = vadd.f32 %v73, %v390
  %v392 = vpop.f32.mrb[0].mxu0
  %393 = vmatprep.mubr.f32.mxu0 0.0
  %394 = vmatmul.mubr.f32.gmra.mrb[0].mxu0 %v158
  %v395 = vpop.f32.mrb[0].mxu0
  %v396 = vadd.f32 %v73, %v395
  %v397 = vpop.f32.mrb[0].mxu0
  %398 = vmatprep.mubr.f32.mxu0 0.0
  %399 = vmatmul.mubr.f32.gmra.mrb[0].mxu0 %v161
  %v400 = vpop.f32.mrb[0].mxu0
  %v401 = vadd.f32 %v73, %v400
  %v402 = vpop.f32.mrb[0].mxu0
  %403 = vmatprep.mubr.f32.mxu0 0.0
  %404 = vmatmul.mubr.f32.gmra.mrb[0].mxu0 %v164
  %v405 = vpop.f32.mrb[0].mxu0
  %v406 = vadd.f32 %v73, %v405
  %v407 = vpop.f32.mrb[0].mxu0
  %408 = vmatprep.mubr.f32.mxu0 0.0
  %409 = vmatmul.mubr.f32.gmra.mrb[0].mxu0 %v167
  %v410 = vpop.f32.mrb[0].mxu0
  %v411 = vadd.f32 %v73, %v410
  %v412 = vpop.f32.mrb[0].mxu0
  %413 = vmatprep.mubr.f32.mxu0 0.0
  %414 = vmatmul.mubr.f32.gmra.mrb[0].mxu0 %v170
  %v415 = vpop.f32.mrb[0].mxu0
  %v416 = vadd.f32 %v73, %v415
  %v417 = vpop.f32.mrb[0].mxu0
  %418 = vmatprep.mubr.f32.mxu0 0.0
  %419 = vmatmul.mubr.f32.gmra.mrb[0].mxu0 %v173
  %v420 = vpop.f32.mrb[0].mxu0
  %v421 = vadd.f32 %v73, %v420
  %v422 = vpop.f32.mrb[0].mxu0
  %423 = vmatprep.mubr.f32.mxu0 0.0
  %424 = vmatmul.mubr.f32.gmra.mrb[0].mxu0 %v176
  %v425 = vpop.f32.mrb[0].mxu0
  %v426 = vadd.f32 %v73, %v425
  %v427 = vpop.f32.mrb[0].mxu0
  %428 = vmatprep.mubr.f32.mxu0 0.0
  %429 = vmatmul.mubr.f32.gmra.mrb[0].mxu0 %v179
  %v430 = vpop.f32.mrb[0].mxu0
  %v431 = vadd.f32 %v73, %v430
  %v432 = vpop.f32.mrb[0].mxu0
  %433 = vmatprep.mubr.f32.mxu0 0.0
  %434 = vmatmul.mubr.f32.gmra.mrb[0].mxu0 %v182
  %v435 = vpop.f32.mrb[0].mxu0
  %v436 = vadd.f32 %v73, %v435
  %v437 = vpop.f32.mrb[0].mxu0
  %438 = vmatprep.mubr.f32.mxu0 0.0
  %439 = vmatmul.mubr.f32.gmra.mrb[0].mxu0 %v185
  %v440 = vpop.f32.mrb[0].mxu0
  %v441 = vadd.f32 %v73, %v440
  %v442 = vpop.f32.mrb[0].mxu0
  %443 = vmatprep.mubr.f32.mxu0 0.0
  %444 = vmatmul.mubr.f32.gmra.mrb[0].mxu0 %v188
  %v445 = vpop.f32.mrb[0].mxu0
  %v446 = vadd.f32 %v73, %v445
  %v447 = vpop.f32.mrb[0].mxu0
  %448 = vdwg.mxu0
  %v449 = vmax.f32 %v261, 0.0
  %v450 = vmax.f32 %v266, 0.0
  %v451 = vmax.f32 %v271, 0.0
  %v452 = vmax.f32 %v276, 0.0
  %v453 = vmax.f32 %v281, 0.0
  %v454 = vmax.f32 %v286, 0.0
  %v455 = vmax.f32 %v291, 0.0
  %v456 = vmax.f32 %v296, 0.0
  %v457 = vmax.f32 %v301, 0.0
  %v458 = vmax.f32 %v306, 0.0
  %v459 = vmax.f32 %v311, 0.0
  %v460 = vmax.f32 %v316, 0.0
  %v461 = vmax.f32 %v321, 0.0
  %v462 = vmax.f32 %v326, 0.0
  %v463 = vmax.f32 %v331, 0.0
  %v464 = vmax.f32 %v336, 0.0
  %v465 = vmax.f32 %v341, 0.0
  %v466 = vmax.f32 %v346, 0.0
  %v467 = vmax.f32 %v351, 0.0
  %v468 = vmax.f32 %v356, 0.0
  %v469 = vmax.f32 %v361, 0.0
  %v470 = vmax.f32 %v366, 0.0
  %v471 = vmax.f32 %v371, 0.0
  %v472 = vmax.f32 %v376, 0.0
  %v473 = vmax.f32 %v381, 0.0
  %v474 = vmax.f32 %v386, 0.0
  %v475 = vmax.f32 %v391, 0.0
  %v476 = vmax.f32 %v396, 0.0
  %v477 = vmax.f32 %v401, 0.0
  %v478 = vmax.f32 %v406, 0.0
  %v479 = vmax.f32 %v411, 0.0
  %v480 = vmax.f32 %v416, 0.0
  %v481 = vmax.f32 %v421, 0.0
  %v482 = vmax.f32 %v426, 0.0
  %v483 = vmax.f32 %v431, 0.0
  %v484 = vmax.f32 %v436, 0.0
  %v485 = vmax.f32 %v441, 0.0
  %v486 = vmax.f32 %v446, 0.0
  %v487 = vld [vmem:[%s3] sm:$0xff]
  %v488 = vld [vmem:[%s3 + $0x8] sm:$0xff]
  %v489 = vld [vmem:[%s3 + $0x10] sm:$0xff]
  %v490 = vld [vmem:[%s3 + $0x18] sm:$0xff]
  %v491 = vld [vmem:[%s3 + $0x20] sm:$0xff]
  %v492 = vld [vmem:[%s4] sm:$0x1]
  %v494 = vlaneseq
  %v495 = vshrl.u32 %v494, 7
  %v496 = vsub.s32 0, %v495
  %v497 = vrot.slane %v492, %v496
  %vm499 = vcmask 326656
  %v501 = vsel %vm499, %v449, 0
  %v504 = vsel %vm499, %v450, 0
  %v507 = vsel %vm499, %v451, 0
  %v510 = vsel %vm499, %v452, 0
  %v513 = vsel %vm499, %v453, 0
  %v516 = vsel %vm499, %v454, 0
  %v519 = vsel %vm499, %v455, 0
  %v522 = vsel %vm499, %v456, 0
  %v525 = vsel %vm499, %v457, 0
  %v528 = vsel %vm499, %v458, 0
  %v531 = vsel %vm499, %v459, 0
  %v534 = vsel %vm499, %v460, 0
  %v537 = vsel %vm499, %v461, 0
  %v540 = vsel %vm499, %v462, 0
  %v543 = vsel %vm499, %v463, 0
  %v546 = vsel %vm499, %v464, 0
  %v549 = vsel %vm499, %v465, 0
  %v552 = vsel %vm499, %v466, 0
  %v555 = vsel %vm499, %v467, 0
  %v558 = vsel %vm499, %v468, 0
  %v561 = vsel %vm499, %v469, 0
  %v564 = vsel %vm499, %v470, 0
  %v567 = vsel %vm499, %v471, 0
  %v570 = vsel %vm499, %v472, 0
  %v573 = vsel %vm499, %v473, 0
  %v576 = vsel %vm499, %v474, 0
  %v579 = vsel %vm499, %v475, 0
  %v582 = vsel %vm499, %v476, 0
  %v585 = vsel %vm499, %v477, 0
  %v588 = vsel %vm499, %v478, 0
  %v591 = vsel %vm499, %v479, 0
  %v594 = vsel %vm499, %v480, 0
  %v597 = vsel %vm499, %v481, 0
  %v600 = vsel %vm499, %v482, 0
  %v603 = vsel %vm499, %v483, 0
  %v606 = vsel %vm499, %v484, 0
  %v609 = vsel %vm499, %v485, 0
  %v612 = vsel %vm499, %v486, 0
  %614 = vmatprep.subr.mxu0 0.0
  %615 = vmatpush1.msra.mxu0 %v487
  %616 = vmatprep.subr.mxu0 0.0
  %617 = vmatpush1.msra.mxu0 %v488
  %618 = vmatprep.subr.mxu0 0.0
  %619 = vmatpush1.msra.mxu0 %v489
  %620 = vmatprep.subr.mxu0 0.0
  %621 = vmatpush1.msra.mxu0 %v490
  %622 = vmatprep.subr.mxu0 0.0
  %623 = vmatpush1.msra.mxu0 %v491
  %624 = vmatprep.subr.mxu0 0.0
  %625 = vmatpush1.msra.mxu0 0.0
  %626 = vmatprep.subr.mxu0 0.0
  %627 = vmatpush1.msra.mxu0 0.0
  %628 = vmatprep.subr.mxu0 0.0
  %629 = vmatpush1.msra.mxu0 0.0
  %630 = vmatprep.subr.mxu0 0.0
  %631 = vmatpush1.msra.mxu0 0.0
  %632 = vmatprep.subr.mxu0 0.0
  %633 = vmatpush1.msra.mxu0 0.0
  %634 = vmatprep.subr.mxu0 0.0
  %635 = vmatpush1.msra.mxu0 0.0
  %636 = vmatprep.subr.mxu0 0.0
  %637 = vmatpush1.msra.mxu0 0.0
  %638 = vmatprep.subr.mxu0 0.0
  %639 = vmatpush1.msra.mxu0 0.0
  %640 = vmatprep.subr.mxu0 0.0
  %641 = vmatpush1.msra.mxu0 0.0
  %642 = vmatprep.subr.mxu0 0.0
  %643 = vmatpush1.msra.mxu0 0.0
  %644 = vmatprep.subr.mxu0 0.0
  %645 = vmatpush1.msra.mxu0 0.0
  %646 = vmatprep.subr.mxu0 0.0
  %647 = vmatpush1.msra.mxu0 0.0
  %648 = vmatprep.subr.mxu0 0.0
  %649 = vmatpush1.msra.mxu0 0.0
  %650 = vmatprep.subr.mxu0 0.0
  %651 = vmatpush1.msra.mxu0 0.0
  %652 = vmatprep.subr.mxu0 0.0
  %653 = vmatpush1.msra.mxu0 0.0
  %654 = vmatprep.subr.mxu0 0.0
  %655 = vmatpush1.msra.mxu0 0.0
  %656 = vmatprep.subr.mxu0 0.0
  %657 = vmatpush1.msra.mxu0 0.0
  %658 = vmatprep.subr.mxu0 0.0
  %659 = vmatpush1.msra.mxu0 0.0
  %660 = vmatprep.subr.mxu0 0.0
  %661 = vmatpush1.msra.mxu0 0.0
  %662 = vmatprep.subr.mxu0 0.0
  %663 = vmatpush1.msra.mxu0 0.0
  %664 = vmatprep.subr.mxu0 0.0
  %665 = vmatpush1.msra.mxu0 0.0
  %666 = vmatprep.subr.mxu0 0.0
  %667 = vmatpush1.msra.mxu0 0.0
  %668 = vmatprep.subr.mxu0 0.0
  %669 = vmatpush1.msra.mxu0 0.0
  %670 = vmatprep.subr.mxu0 0.0
  %671 = vmatpush1.msra.mxu0 0.0
  %672 = vmatprep.subr.mxu0 0.0
  %673 = vmatpush1.msra.mxu0 0.0
  %674 = vmatprep.subr.mxu0 0.0
  %675 = vmatpush1.msra.mxu0 0.0
  %676 = vmatprep.subr.mxu0 0.0
  %677 = vmatpush1.msra.mxu0 0.0
  %678 = vmatprep.mubr.f32.mxu0 0.0
  %679 = vmatmul.mubr.f32.gmra.mrb[0].mxu0 %v501
  %v680 = vpop.f32.mrb[0].mxu0
  %v681 = vadd.f32 %v497, %v680
  %v682 = vpop.f32.mrb[0].mxu0
  %683 = vmatprep.mubr.f32.mxu0 0.0
  %684 = vmatmul.mubr.f32.gmra.mrb[0].mxu0 %v504
  %v685 = vpop.f32.mrb[0].mxu0
  %v686 = vadd.f32 %v497, %v685
  %v687 = vpop.f32.mrb[0].mxu0
  %688 = vmatprep.mubr.f32.mxu0 0.0
  %689 = vmatmul.mubr.f32.gmra.mrb[0].mxu0 %v507
  %v690 = vpop.f32.mrb[0].mxu0
  %v691 = vadd.f32 %v497, %v690
  %v692 = vpop.f32.mrb[0].mxu0
  %693 = vmatprep.mubr.f32.mxu0 0.0
  %694 = vmatmul.mubr.f32.gmra.mrb[0].mxu0 %v510
  %v695 = vpop.f32.mrb[0].mxu0
  %v696 = vadd.f32 %v497, %v695
  %v697 = vpop.f32.mrb[0].mxu0
  %698 = vmatprep.mubr.f32.mxu0 0.0
  %699 = vmatmul.mubr.f32.gmra.mrb[0].mxu0 %v513
  %v700 = vpop.f32.mrb[0].mxu0
  %v701 = vadd.f32 %v497, %v700
  %v702 = vpop.f32.mrb[0].mxu0
  %703 = vmatprep.mubr.f32.mxu0 0.0
  %704 = vmatmul.mubr.f32.gmra.mrb[0].mxu0 %v516
  %v705 = vpop.f32.mrb[0].mxu0
  %v706 = vadd.f32 %v497, %v705
  %v707 = vpop.f32.mrb[0].mxu0
  %708 = vmatprep.mubr.f32.mxu0 0.0
  %709 = vmatmul.mubr.f32.gmra.mrb[0].mxu0 %v519
  %v710 = vpop.f32.mrb[0].mxu0
  %v711 = vadd.f32 %v497, %v710
  %v712 = vpop.f32.mrb[0].mxu0
  %713 = vmatprep.mubr.f32.mxu0 0.0
  %714 = vmatmul.mubr.f32.gmra.mrb[0].mxu0 %v522
  %v715 = vpop.f32.mrb[0].mxu0
  %v716 = vadd.f32 %v497, %v715
  %v717 = vpop.f32.mrb[0].mxu0
  %718 = vmatprep.mubr.f32.mxu0 0.0
  %719 = vmatmul.mubr.f32.gmra.mrb[0].mxu0 %v525
  %v720 = vpop.f32.mrb[0].mxu0
  %v721 = vadd.f32 %v497, %v720
  %v722 = vpop.f32.mrb[0].mxu0
  %723 = vmatprep.mubr.f32.mxu0 0.0
  %724 = vmatmul.mubr.f32.gmra.mrb[0].mxu0 %v528
  %v725 = vpop.f32.mrb[0].mxu0
  %v726 = vadd.f32 %v497, %v725
  %v727 = vpop.f32.mrb[0].mxu0
  %728 = vmatprep.mubr.f32.mxu0 0.0
  %729 = vmatmul.mubr.f32.gmra.mrb[0].mxu0 %v531
  %v730 = vpop.f32.mrb[0].mxu0
  %v731 = vadd.f32 %v497, %v730
  %v732 = vpop.f32.mrb[0].mxu0
  %733 = vmatprep.mubr.f32.mxu0 0.0
  %734 = vmatmul.mubr.f32.gmra.mrb[0].mxu0 %v534
  %v735 = vpop.f32.mrb[0].mxu0
  %v736 = vadd.f32 %v497, %v735
  %v737 = vpop.f32.mrb[0].mxu0
  %738 = vmatprep.mubr.f32.mxu0 0.0
  %739 = vmatmul.mubr.f32.gmra.mrb[0].mxu0 %v537
  %v740 = vpop.f32.mrb[0].mxu0
  %v741 = vadd.f32 %v497, %v740
  %v742 = vpop.f32.mrb[0].mxu0
  %743 = vmatprep.mubr.f32.mxu0 0.0
  %744 = vmatmul.mubr.f32.gmra.mrb[0].mxu0 %v540
  %v745 = vpop.f32.mrb[0].mxu0
  %v746 = vadd.f32 %v497, %v745
  %v747 = vpop.f32.mrb[0].mxu0
  %748 = vmatprep.mubr.f32.mxu0 0.0
  %749 = vmatmul.mubr.f32.gmra.mrb[0].mxu0 %v543
  %v750 = vpop.f32.mrb[0].mxu0
  %v751 = vadd.f32 %v497, %v750
  %v752 = vpop.f32.mrb[0].mxu0
  %753 = vmatprep.mubr.f32.mxu0 0.0
  %754 = vmatmul.mubr.f32.gmra.mrb[0].mxu0 %v546
  %v755 = vpop.f32.mrb[0].mxu0
  %v756 = vadd.f32 %v497, %v755
  %v757 = vpop.f32.mrb[0].mxu0
  %758 = vmatprep.mubr.f32.mxu0 0.0
  %759 = vmatmul.mubr.f32.gmra.mrb[0].mxu0 %v549
  %v760 = vpop.f32.mrb[0].mxu0
  %v761 = vadd.f32 %v497, %v760
  %v762 = vpop.f32.mrb[0].mxu0
  %763 = vmatprep.mubr.f32.mxu0 0.0
  %764 = vmatmul.mubr.f32.gmra.mrb[0].mxu0 %v552
  %v765 = vpop.f32.mrb[0].mxu0
  %v766 = vadd.f32 %v497, %v765
  %v767 = vpop.f32.mrb[0].mxu0
  %768 = vmatprep.mubr.f32.mxu0 0.0
  %769 = vmatmul.mubr.f32.gmra.mrb[0].mxu0 %v555
  %v770 = vpop.f32.mrb[0].mxu0
  %v771 = vadd.f32 %v497, %v770
  %v772 = vpop.f32.mrb[0].mxu0
  %773 = vmatprep.mubr.f32.mxu0 0.0
  %774 = vmatmul.mubr.f32.gmra.mrb[0].mxu0 %v558
  %v775 = vpop.f32.mrb[0].mxu0
  %v776 = vadd.f32 %v497, %v775
  %v777 = vpop.f32.mrb[0].mxu0
  %778 = vmatprep.mubr.f32.mxu0 0.0
  %779 = vmatmul.mubr.f32.gmra.mrb[0].mxu0 %v561
  %v780 = vpop.f32.mrb[0].mxu0
  %v781 = vadd.f32 %v497, %v780
  %v782 = vpop.f32.mrb[0].mxu0
  %783 = vmatprep.mubr.f32.mxu0 0.0
  %784 = vmatmul.mubr.f32.gmra.mrb[0].mxu0 %v564
  %v785 = vpop.f32.mrb[0].mxu0
  %v786 = vadd.f32 %v497, %v785
  %v787 = vpop.f32.mrb[0].mxu0
  %788 = vmatprep.mubr.f32.mxu0 0.0
  %789 = vmatmul.mubr.f32.gmra.mrb[0].mxu0 %v567
  %v790 = vpop.f32.mrb[0].mxu0
  %v791 = vadd.f32 %v497, %v790
  %v792 = vpop.f32.mrb[0].mxu0
  %793 = vmatprep.mubr.f32.mxu0 0.0
  %794 = vmatmul.mubr.f32.gmra.mrb[0].mxu0 %v570
  %v795 = vpop.f32.mrb[0].mxu0
  %v796 = vadd.f32 %v497, %v795
  %v797 = vpop.f32.mrb[0].mxu0
  %798 = vmatprep.mubr.f32.mxu0 0.0
  %799 = vmatmul.mubr.f32.gmra.mrb[0].mxu0 %v573
  %v800 = vpop.f32.mrb[0].mxu0
  %v801 = vadd.f32 %v497, %v800
  %v802 = vpop.f32.mrb[0].mxu0
  %803 = vmatprep.mubr.f32.mxu0 0.0
  %804 = vmatmul.mubr.f32.gmra.mrb[0].mxu0 %v576
  %v805 = vpop.f32.mrb[0].mxu0
  %v806 = vadd.f32 %v497, %v805
  %v807 = vpop.f32.mrb[0].mxu0
  %808 = vmatprep.mubr.f32.mxu0 0.0
  %809 = vmatmul.mubr.f32.gmra.mrb[0].mxu0 %v579
  %v810 = vpop.f32.mrb[0].mxu0
  %v811 = vadd.f32 %v497, %v810
  %v812 = vpop.f32.mrb[0].mxu0
  %813 = vmatprep.mubr.f32.mxu0 0.0
  %814 = vmatmul.mubr.f32.gmra.mrb[0].mxu0 %v582
  %v815 = vpop.f32.mrb[0].mxu0
  %v816 = vadd.f32 %v497, %v815
  %v817 = vpop.f32.mrb[0].mxu0
  %818 = vmatprep.mubr.f32.mxu0 0.0
  %819 = vmatmul.mubr.f32.gmra.mrb[0].mxu0 %v585
  %v820 = vpop.f32.mrb[0].mxu0
  %v821 = vadd.f32 %v497, %v820
  %v822 = vpop.f32.mrb[0].mxu0
  %823 = vmatprep.mubr.f32.mxu0 0.0
  %824 = vmatmul.mubr.f32.gmra.mrb[0].mxu0 %v588
  %v825 = vpop.f32.mrb[0].mxu0
  %v826 = vadd.f32 %v497, %v825
  %v827 = vpop.f32.mrb[0].mxu0
  %828 = vmatprep.mubr.f32.mxu0 0.0
  %829 = vmatmul.mubr.f32.gmra.mrb[0].mxu0 %v591
  %v830 = vpop.f32.mrb[0].mxu0
  %v831 = vadd.f32 %v497, %v830
  %v832 = vpop.f32.mrb[0].mxu0
  %833 = vmatprep.mubr.f32.mxu0 0.0
  %834 = vmatmul.mubr.f32.gmra.mrb[0].mxu0 %v594
  %v835 = vpop.f32.mrb[0].mxu0
  %v836 = vadd.f32 %v497, %v835
  %v837 = vpop.f32.mrb[0].mxu0
  %838 = vmatprep.mubr.f32.mxu0 0.0
  %839 = vmatmul.mubr.f32.gmra.mrb[0].mxu0 %v597
  %v840 = vpop.f32.mrb[0].mxu0
  %v841 = vadd.f32 %v497, %v840
  %v842 = vpop.f32.mrb[0].mxu0
  %843 = vmatprep.mubr.f32.mxu0 0.0
  %844 = vmatmul.mubr.f32.gmra.mrb[0].mxu0 %v600
  %v845 = vpop.f32.mrb[0].mxu0
  %v846 = vadd.f32 %v497, %v845
  %v847 = vpop.f32.mrb[0].mxu0
  %848 = vmatprep.mubr.f32.mxu0 0.0
  %849 = vmatmul.mubr.f32.gmra.mrb[0].mxu0 %v603
  %v850 = vpop.f32.mrb[0].mxu0
  %v851 = vadd.f32 %v497, %v850
  %v852 = vpop.f32.mrb[0].mxu0
  %853 = vmatprep.mubr.f32.mxu0 0.0
  %854 = vmatmul.mubr.f32.gmra.mrb[0].mxu0 %v606
  %v855 = vpop.f32.mrb[0].mxu0
  %v856 = vadd.f32 %v497, %v855
  %v857 = vpop.f32.mrb[0].mxu0
  %858 = vmatprep.mubr.f32.mxu0 0.0
  %859 = vmatmul.mubr.f32.gmra.mrb[0].mxu0 %v609
  %v860 = vpop.f32.mrb[0].mxu0
  %v861 = vadd.f32 %v497, %v860
  %v862 = vpop.f32.mrb[0].mxu0
  %863 = vmatprep.mubr.f32.mxu0 0.0
  %864 = vmatmul.mubr.f32.gmra.mrb[0].mxu0 %v612
  %v865 = vpop.f32.mrb[0].mxu0
  %v866 = vadd.f32 %v497, %v865
  %v867 = vpop.f32.mrb[0].mxu0
  %868 = vdwg.mxu0
  %v869 = vmax.f32 %v681, 0.0
  %v870 = vmax.f32 %v686, 0.0
  %v871 = vmax.f32 %v691, 0.0
  %v872 = vmax.f32 %v696, 0.0
  %v873 = vmax.f32 %v701, 0.0
  %v874 = vmax.f32 %v706, 0.0
  %v875 = vmax.f32 %v711, 0.0
  %v876 = vmax.f32 %v716, 0.0
  %v877 = vmax.f32 %v721, 0.0
  %v878 = vmax.f32 %v726, 0.0
  %v879 = vmax.f32 %v731, 0.0
  %v880 = vmax.f32 %v736, 0.0
  %v881 = vmax.f32 %v741, 0.0
  %v882 = vmax.f32 %v746, 0.0
  %v883 = vmax.f32 %v751, 0.0
  %v884 = vmax.f32 %v756, 0.0
  %v885 = vmax.f32 %v761, 0.0
  %v886 = vmax.f32 %v766, 0.0
  %v887 = vmax.f32 %v771, 0.0
  %v888 = vmax.f32 %v776, 0.0
  %v889 = vmax.f32 %v781, 0.0
  %v890 = vmax.f32 %v786, 0.0
  %v891 = vmax.f32 %v791, 0.0
  %v892 = vmax.f32 %v796, 0.0
  %v893 = vmax.f32 %v801, 0.0
  %v894 = vmax.f32 %v806, 0.0
  %v895 = vmax.f32 %v811, 0.0
  %v896 = vmax.f32 %v816, 0.0
  %v897 = vmax.f32 %v821, 0.0
  %v898 = vmax.f32 %v826, 0.0
  %v899 = vmax.f32 %v831, 0.0
  %v900 = vmax.f32 %v836, 0.0
  %v901 = vmax.f32 %v841, 0.0
  %v902 = vmax.f32 %v846, 0.0
  %v903 = vmax.f32 %v851, 0.0
  %v904 = vmax.f32 %v856, 0.0
  %v905 = vmax.f32 %v861, 0.0
  %v906 = vmax.f32 %v866, 0.0
  %v907 = vld [vmem:[%s5] sm:$0xff]
  %v908 = vld [vmem:[%s5 + $0x8] sm:$0xff]
  %v909 = vld [vmem:[%s5 + $0x10] sm:$0xff]
  %v910 = vld [vmem:[%s5 + $0x18] sm:$0xff]
  %v911 = vld [vmem:[%s5 + $0x20] sm:$0xff]
  %v912 = vld [vmem:[%s5 + $0x28] sm:$0xff]
  %v913 = vld [vmem:[%s5 + $0x30] sm:$0x3]
  %v914 = vld [vmem:[%s6] sm:$0x1]
  %v916 = vlaneseq
  %v917 = vshrl.u32 %v916, 7
  %v918 = vsub.s32 0, %v917
  %v919 = vrot.slane %v914, %v918
  %vm921 = vcmask 408576
  %v923 = vsel %vm921, %v869, 0
  %v926 = vsel %vm921, %v870, 0
  %v929 = vsel %vm921, %v871, 0
  %v932 = vsel %vm921, %v872, 0
  %v935 = vsel %vm921, %v873, 0
  %v938 = vsel %vm921, %v874, 0
  %v941 = vsel %vm921, %v875, 0
  %v944 = vsel %vm921, %v876, 0
  %v947 = vsel %vm921, %v877, 0
  %v950 = vsel %vm921, %v878, 0
  %v953 = vsel %vm921, %v879, 0
  %v956 = vsel %vm921, %v880, 0
  %v959 = vsel %vm921, %v881, 0
  %v962 = vsel %vm921, %v882, 0
  %v965 = vsel %vm921, %v883, 0
  %v968 = vsel %vm921, %v884, 0
  %v971 = vsel %vm921, %v885, 0
  %v974 = vsel %vm921, %v886, 0
  %v977 = vsel %vm921, %v887, 0
  %v980 = vsel %vm921, %v888, 0
  %v983 = vsel %vm921, %v889, 0
  %v986 = vsel %vm921, %v890, 0
  %v989 = vsel %vm921, %v891, 0
  %v992 = vsel %vm921, %v892, 0
  %v995 = vsel %vm921, %v893, 0
  %v998 = vsel %vm921, %v894, 0
  %v1001 = vsel %vm921, %v895, 0
  %v1004 = vsel %vm921, %v896, 0
  %v1007 = vsel %vm921, %v897, 0
  %v1010 = vsel %vm921, %v898, 0
  %v1013 = vsel %vm921, %v899, 0
  %v1016 = vsel %vm921, %v900, 0
  %v1019 = vsel %vm921, %v901, 0
  %v1022 = vsel %vm921, %v902, 0
  %v1025 = vsel %vm921, %v903, 0
  %v1028 = vsel %vm921, %v904, 0
  %v1031 = vsel %vm921, %v905, 0
  %v1034 = vsel %vm921, %v906, 0
  %vm1036 = vcmask 1041408
  %v1038 = vsel %vm1036, %v913, 0
  %1040 = vmatprep.subr.mxu0 0.0
  %1041 = vmatpush1.msra.mxu0 %v907
  %1042 = vmatprep.subr.mxu0 0.0
  %1043 = vmatpush1.msra.mxu0 %v908
  %1044 = vmatprep.subr.mxu0 0.0
  %1045 = vmatpush1.msra.mxu0 %v909
  %1046 = vmatprep.subr.mxu0 0.0
  %1047 = vmatpush1.msra.mxu0 %v910
  %1048 = vmatprep.subr.mxu0 0.0
  %1049 = vmatpush1.msra.mxu0 %v911
  %1050 = vmatprep.subr.mxu0 0.0
  %1051 = vmatpush1.msra.mxu0 %v912
  %1052 = vmatprep.subr.mxu0 0.0
  %1053 = vmatpush1.msra.mxu0 %v1038
  %1054 = vmatprep.subr.mxu0 0.0
  %1055 = vmatpush1.msra.mxu0 0.0
  %1056 = vmatprep.subr.mxu0 0.0
  %1057 = vmatpush1.msra.mxu0 0.0
  %1058 = vmatprep.subr.mxu0 0.0
  %1059 = vmatpush1.msra.mxu0 0.0
  %1060 = vmatprep.subr.mxu0 0.0
  %1061 = vmatpush1.msra.mxu0 0.0
  %1062 = vmatprep.subr.mxu0 0.0
  %1063 = vmatpush1.msra.mxu0 0.0
  %1064 = vmatprep.subr.mxu0 0.0
  %1065 = vmatpush1.msra.mxu0 0.0
  %1066 = vmatprep.subr.mxu0 0.0
  %1067 = vmatpush1.msra.mxu0 0.0
  %1068 = vmatprep.subr.mxu0 0.0
  %1069 = vmatpush1.msra.mxu0 0.0
  %1070 = vmatprep.subr.mxu0 0.0
  %1071 = vmatpush1.msra.mxu0 0.0
  %1072 = vmatprep.subr.mxu0 0.0
  %1073 = vmatpush1.msra.mxu0 0.0
  %1074 = vmatprep.subr.mxu0 0.0
  %1075 = vmatpush1.msra.mxu0 0.0
  %1076 = vmatprep.subr.mxu0 0.0
  %1077 = vmatpush1.msra.mxu0 0.0
  %1078 = vmatprep.subr.mxu0 0.0
  %1079 = vmatpush1.msra.mxu0 0.0
  %1080 = vmatprep.subr.mxu0 0.0
  %1081 = vmatpush1.msra.mxu0 0.0
  %1082 = vmatprep.subr.mxu0 0.0
  %1083 = vmatpush1.msra.mxu0 0.0
  %1084 = vmatprep.subr.mxu0 0.0
  %1085 = vmatpush1.msra.mxu0 0.0
  %1086 = vmatprep.subr.mxu0 0.0
  %1087 = vmatpush1.msra.mxu0 0.0
  %1088 = vmatprep.subr.mxu0 0.0
  %1089 = vmatpush1.msra.mxu0 0.0
  %1090 = vmatprep.subr.mxu0 0.0
  %1091 = vmatpush1.msra.mxu0 0.0
  %1092 = vmatprep.subr.mxu0 0.0
  %1093 = vmatpush1.msra.mxu0 0.0
  %1094 = vmatprep.subr.mxu0 0.0
  %1095 = vmatpush1.msra.mxu0 0.0
  %1096 = vmatprep.subr.mxu0 0.0
  %1097 = vmatpush1.msra.mxu0 0.0
  %1098 = vmatprep.subr.mxu0 0.0
  %1099 = vmatpush1.msra.mxu0 0.0
  %1100 = vmatprep.subr.mxu0 0.0
  %1101 = vmatpush1.msra.mxu0 0.0
  %1102 = vmatprep.subr.mxu0 0.0
  %1103 = vmatpush1.msra.mxu0 0.0
  %1104 = vmatprep.mubr.f32.mxu0 0.0
  %1105 = vmatmul.mubr.f32.gmra.mrb[0].mxu0 %v923
  %v1106 = vpop.f32.mrb[0].mxu0
  %v1107 = vadd.f32 %v919, %v1106
  %v1108 = vpop.f32.mrb[0].mxu0
  %1109 = vmatprep.mubr.f32.mxu0 0.0
  %1110 = vmatmul.mubr.f32.gmra.mrb[0].mxu0 %v926
  %v1111 = vpop.f32.mrb[0].mxu0
  %v1112 = vadd.f32 %v919, %v1111
  %v1113 = vpop.f32.mrb[0].mxu0
  %1114 = vmatprep.mubr.f32.mxu0 0.0
  %1115 = vmatmul.mubr.f32.gmra.mrb[0].mxu0 %v929
  %v1116 = vpop.f32.mrb[0].mxu0
  %v1117 = vadd.f32 %v919, %v1116
  %v1118 = vpop.f32.mrb[0].mxu0
  %1119 = vmatprep.mubr.f32.mxu0 0.0
  %1120 = vmatmul.mubr.f32.gmra.mrb[0].mxu0 %v932
  %v1121 = vpop.f32.mrb[0].mxu0
  %v1122 = vadd.f32 %v919, %v1121
  %v1123 = vpop.f32.mrb[0].mxu0
  %1124 = vmatprep.mubr.f32.mxu0 0.0
  %1125 = vmatmul.mubr.f32.gmra.mrb[0].mxu0 %v935
  %v1126 = vpop.f32.mrb[0].mxu0
  %v1127 = vadd.f32 %v919, %v1126
  %v1128 = vpop.f32.mrb[0].mxu0
  %1129 = vmatprep.mubr.f32.mxu0 0.0
  %1130 = vmatmul.mubr.f32.gmra.mrb[0].mxu0 %v938
  %v1131 = vpop.f32.mrb[0].mxu0
  %v1132 = vadd.f32 %v919, %v1131
  %v1133 = vpop.f32.mrb[0].mxu0
  %1134 = vmatprep.mubr.f32.mxu0 0.0
  %1135 = vmatmul.mubr.f32.gmra.mrb[0].mxu0 %v941
  %v1136 = vpop.f32.mrb[0].mxu0
  %v1137 = vadd.f32 %v919, %v1136
  %v1138 = vpop.f32.mrb[0].mxu0
  %1139 = vmatprep.mubr.f32.mxu0 0.0
  %1140 = vmatmul.mubr.f32.gmra.mrb[0].mxu0 %v944
  %v1141 = vpop.f32.mrb[0].mxu0
  %v1142 = vadd.f32 %v919, %v1141
  %v1143 = vpop.f32.mrb[0].mxu0
  %1144 = vmatprep.mubr.f32.mxu0 0.0
  %1145 = vmatmul.mubr.f32.gmra.mrb[0].mxu0 %v947
  %v1146 = vpop.f32.mrb[0].mxu0
  %v1147 = vadd.f32 %v919, %v1146
  %v1148 = vpop.f32.mrb[0].mxu0
  %1149 = vmatprep.mubr.f32.mxu0 0.0
  %1150 = vmatmul.mubr.f32.gmra.mrb[0].mxu0 %v950
  %v1151 = vpop.f32.mrb[0].mxu0
  %v1152 = vadd.f32 %v919, %v1151
  %v1153 = vpop.f32.mrb[0].mxu0
  %1154 = vmatprep.mubr.f32.mxu0 0.0
  %1155 = vmatmul.mubr.f32.gmra.mrb[0].mxu0 %v953
  %v1156 = vpop.f32.mrb[0].mxu0
  %v1157 = vadd.f32 %v919, %v1156
  %v1158 = vpop.f32.mrb[0].mxu0
  %1159 = vmatprep.mubr.f32.mxu0 0.0
  %1160 = vmatmul.mubr.f32.gmra.mrb[0].mxu0 %v956
  %v1161 = vpop.f32.mrb[0].mxu0
  %v1162 = vadd.f32 %v919, %v1161
  %v1163 = vpop.f32.mrb[0].mxu0
  %1164 = vmatprep.mubr.f32.mxu0 0.0
  %1165 = vmatmul.mubr.f32.gmra.mrb[0].mxu0 %v959
  %v1166 = vpop.f32.mrb[0].mxu0
  %v1167 = vadd.f32 %v919, %v1166
  %v1168 = vpop.f32.mrb[0].mxu0
  %1169 = vmatprep.mubr.f32.mxu0 0.0
  %1170 = vmatmul.mubr.f32.gmra.mrb[0].mxu0 %v962
  %v1171 = vpop.f32.mrb[0].mxu0
  %v1172 = vadd.f32 %v919, %v1171
  %v1173 = vpop.f32.mrb[0].mxu0
  %1174 = vmatprep.mubr.f32.mxu0 0.0
  %1175 = vmatmul.mubr.f32.gmra.mrb[0].mxu0 %v965
  %v1176 = vpop.f32.mrb[0].mxu0
  %v1177 = vadd.f32 %v919, %v1176
  %v1178 = vpop.f32.mrb[0].mxu0
  %1179 = vmatprep.mubr.f32.mxu0 0.0
  %1180 = vmatmul.mubr.f32.gmra.mrb[0].mxu0 %v968
  %v1181 = vpop.f32.mrb[0].mxu0
  %v1182 = vadd.f32 %v919, %v1181
  %v1183 = vpop.f32.mrb[0].mxu0
  %1184 = vmatprep.mubr.f32.mxu0 0.0
  %1185 = vmatmul.mubr.f32.gmra.mrb[0].mxu0 %v971
  %v1186 = vpop.f32.mrb[0].mxu0
  %v1187 = vadd.f32 %v919, %v1186
  %v1188 = vpop.f32.mrb[0].mxu0
  %1189 = vmatprep.mubr.f32.mxu0 0.0
  %1190 = vmatmul.mubr.f32.gmra.mrb[0].mxu0 %v974
  %v1191 = vpop.f32.mrb[0].mxu0
  %v1192 = vadd.f32 %v919, %v1191
  %v1193 = vpop.f32.mrb[0].mxu0
  %1194 = vmatprep.mubr.f32.mxu0 0.0
  %1195 = vmatmul.mubr.f32.gmra.mrb[0].mxu0 %v977
  %v1196 = vpop.f32.mrb[0].mxu0
  %v1197 = vadd.f32 %v919, %v1196
  %v1198 = vpop.f32.mrb[0].mxu0
  %1199 = vmatprep.mubr.f32.mxu0 0.0
  %1200 = vmatmul.mubr.f32.gmra.mrb[0].mxu0 %v980
  %v1201 = vpop.f32.mrb[0].mxu0
  %v1202 = vadd.f32 %v919, %v1201
  %v1203 = vpop.f32.mrb[0].mxu0
  %1204 = vmatprep.mubr.f32.mxu0 0.0
  %1205 = vmatmul.mubr.f32.gmra.mrb[0].mxu0 %v983
  %v1206 = vpop.f32.mrb[0].mxu0
  %v1207 = vadd.f32 %v919, %v1206
  %v1208 = vpop.f32.mrb[0].mxu0
  %1209 = vmatprep.mubr.f32.mxu0 0.0
  %1210 = vmatmul.mubr.f32.gmra.mrb[0].mxu0 %v986
  %v1211 = vpop.f32.mrb[0].mxu0
  %v1212 = vadd.f32 %v919, %v1211
  %v1213 = vpop.f32.mrb[0].mxu0
  %1214 = vmatprep.mubr.f32.mxu0 0.0
  %1215 = vmatmul.mubr.f32.gmra.mrb[0].mxu0 %v989
  %v1216 = vpop.f32.mrb[0].mxu0
  %v1217 = vadd.f32 %v919, %v1216
  %v1218 = vpop.f32.mrb[0].mxu0
  %1219 = vmatprep.mubr.f32.mxu0 0.0
  %1220 = vmatmul.mubr.f32.gmra.mrb[0].mxu0 %v992
  %v1221 = vpop.f32.mrb[0].mxu0
  %v1222 = vadd.f32 %v919, %v1221
  %v1223 = vpop.f32.mrb[0].mxu0
  %1224 = vmatprep.mubr.f32.mxu0 0.0
  %1225 = vmatmul.mubr.f32.gmra.mrb[0].mxu0 %v995
  %v1226 = vpop.f32.mrb[0].mxu0
  %v1227 = vadd.f32 %v919, %v1226
  %v1228 = vpop.f32.mrb[0].mxu0
  %1229 = vmatprep.mubr.f32.mxu0 0.0
  %1230 = vmatmul.mubr.f32.gmra.mrb[0].mxu0 %v998
  %v1231 = vpop.f32.mrb[0].mxu0
  %v1232 = vadd.f32 %v919, %v1231
  %v1233 = vpop.f32.mrb[0].mxu0
  %1234 = vmatprep.mubr.f32.mxu0 0.0
  %1235 = vmatmul.mubr.f32.gmra.mrb[0].mxu0 %v1001
  %v1236 = vpop.f32.mrb[0].mxu0
  %v1237 = vadd.f32 %v919, %v1236
  %v1238 = vpop.f32.mrb[0].mxu0
  %1239 = vmatprep.mubr.f32.mxu0 0.0
  %1240 = vmatmul.mubr.f32.gmra.mrb[0].mxu0 %v1004
  %v1241 = vpop.f32.mrb[0].mxu0
  %v1242 = vadd.f32 %v919, %v1241
  %v1243 = vpop.f32.mrb[0].mxu0
  %1244 = vmatprep.mubr.f32.mxu0 0.0
  %1245 = vmatmul.mubr.f32.gmra.mrb[0].mxu0 %v1007
  %v1246 = vpop.f32.mrb[0].mxu0
  %v1247 = vadd.f32 %v919, %v1246
  %v1248 = vpop.f32.mrb[0].mxu0
  %1249 = vmatprep.mubr.f32.mxu0 0.0
  %1250 = vmatmul.mubr.f32.gmra.mrb[0].mxu0 %v1010
  %v1251 = vpop.f32.mrb[0].mxu0
  %v1252 = vadd.f32 %v919, %v1251
  %v1253 = vpop.f32.mrb[0].mxu0
  %1254 = vmatprep.mubr.f32.mxu0 0.0
  %1255 = vmatmul.mubr.f32.gmra.mrb[0].mxu0 %v1013
  %v1256 = vpop.f32.mrb[0].mxu0
  %v1257 = vadd.f32 %v919, %v1256
  %v1258 = vpop.f32.mrb[0].mxu0
  %1259 = vmatprep.mubr.f32.mxu0 0.0
  %1260 = vmatmul.mubr.f32.gmra.mrb[0].mxu0 %v1016
  %v1261 = vpop.f32.mrb[0].mxu0
  %v1262 = vadd.f32 %v919, %v1261
  %v1263 = vpop.f32.mrb[0].mxu0
  %1264 = vmatprep.mubr.f32.mxu0 0.0
  %1265 = vmatmul.mubr.f32.gmra.mrb[0].mxu0 %v1019
  %v1266 = vpop.f32.mrb[0].mxu0
  %v1267 = vadd.f32 %v919, %v1266
  %v1268 = vpop.f32.mrb[0].mxu0
  %1269 = vmatprep.mubr.f32.mxu0 0.0
  %1270 = vmatmul.mubr.f32.gmra.mrb[0].mxu0 %v1022
  %v1271 = vpop.f32.mrb[0].mxu0
  %v1272 = vadd.f32 %v919, %v1271
  %v1273 = vpop.f32.mrb[0].mxu0
  %1274 = vmatprep.mubr.f32.mxu0 0.0
  %1275 = vmatmul.mubr.f32.gmra.mrb[0].mxu0 %v1025
  %v1276 = vpop.f32.mrb[0].mxu0
  %v1277 = vadd.f32 %v919, %v1276
  %v1278 = vpop.f32.mrb[0].mxu0
  %1279 = vmatprep.mubr.f32.mxu0 0.0
  %1280 = vmatmul.mubr.f32.gmra.mrb[0].mxu0 %v1028
  %v1281 = vpop.f32.mrb[0].mxu0
  %v1282 = vadd.f32 %v919, %v1281
  %v1283 = vpop.f32.mrb[0].mxu0
  %1284 = vmatprep.mubr.f32.mxu0 0.0
  %1285 = vmatmul.mubr.f32.gmra.mrb[0].mxu0 %v1031
  %v1286 = vpop.f32.mrb[0].mxu0
  %v1287 = vadd.f32 %v919, %v1286
  %v1288 = vpop.f32.mrb[0].mxu0
  %1289 = vmatprep.mubr.f32.mxu0 0.0
  %1290 = vmatmul.mubr.f32.gmra.mrb[0].mxu0 %v1034
  %v1291 = vpop.f32.mrb[0].mxu0
  %v1292 = vadd.f32 %v919, %v1291
  %v1293 = vpop.f32.mrb[0].mxu0
  %1294 = vdwg.mxu0
  %v1295 = vmax.f32 %v1107, 0.0
  %v1296 = vmax.f32 %v1112, 0.0
  %v1297 = vmax.f32 %v1117, 0.0
  %v1298 = vmax.f32 %v1122, 0.0
  %v1299 = vmax.f32 %v1127, 0.0
  %v1300 = vmax.f32 %v1132, 0.0
  %v1301 = vmax.f32 %v1137, 0.0
  %v1302 = vmax.f32 %v1142, 0.0
  %v1303 = vmax.f32 %v1147, 0.0
  %v1304 = vmax.f32 %v1152, 0.0
  %v1305 = vmax.f32 %v1157, 0.0
  %v1306 = vmax.f32 %v1162, 0.0
  %v1307 = vmax.f32 %v1167, 0.0
  %v1308 = vmax.f32 %v1172, 0.0
  %v1309 = vmax.f32 %v1177, 0.0
  %v1310 = vmax.f32 %v1182, 0.0
  %v1311 = vmax.f32 %v1187, 0.0
  %v1312 = vmax.f32 %v1192, 0.0
  %v1313 = vmax.f32 %v1197, 0.0
  %v1314 = vmax.f32 %v1202, 0.0
  %v1315 = vmax.f32 %v1207, 0.0
  %v1316 = vmax.f32 %v1212, 0.0
  %v1317 = vmax.f32 %v1217, 0.0
  %v1318 = vmax.f32 %v1222, 0.0
  %v1319 = vmax.f32 %v1227, 0.0
  %v1320 = vmax.f32 %v1232, 0.0
  %v1321 = vmax.f32 %v1237, 0.0
  %v1322 = vmax.f32 %v1242, 0.0
  %v1323 = vmax.f32 %v1247, 0.0
  %v1324 = vmax.f32 %v1252, 0.0
  %v1325 = vmax.f32 %v1257, 0.0
  %v1326 = vmax.f32 %v1262, 0.0
  %v1327 = vmax.f32 %v1267, 0.0
  %v1328 = vmax.f32 %v1272, 0.0
  %v1329 = vmax.f32 %v1277, 0.0
  %v1330 = vmax.f32 %v1282, 0.0
  %v1331 = vmax.f32 %v1287, 0.0
  %v1332 = vmax.f32 %v1292, 0.0
  %vm1333 = vcmask 80896
  %1334 = vst.msk [vmem:[%s7] sm:$0xff] %vm1333, %v1295
  %1335 = vst.msk [vmem:[%s7 + $0x8] sm:$0xff] %vm1333, %v1296
  %1336 = vst.msk [vmem:[%s7 + $0x10] sm:$0xff] %vm1333, %v1297
  %1337 = vst.msk [vmem:[%s7 + $0x18] sm:$0xff] %vm1333, %v1298
  %1338 = vst.msk [vmem:[%s7 + $0x20] sm:$0xff] %vm1333, %v1299
  %1339 = vst.msk [vmem:[%s7 + $0x28] sm:$0xff] %vm1333, %v1300
  %1340 = vst.msk [vmem:[%s7 + $0x30] sm:$0xff] %vm1333, %v1301
  %1341 = vst.msk [vmem:[%s7 + $0x38] sm:$0xff] %vm1333, %v1302
  %1342 = vst.msk [vmem:[%s7 + $0x40] sm:$0xff] %vm1333, %v1303
  %1343 = vst.msk [vmem:[%s7 + $0x48] sm:$0xff] %vm1333, %v1304
  %1344 = vst.msk [vmem:[%s7 + $0x50] sm:$0xff] %vm1333, %v1305
  %1345 = vst.msk [vmem:[%s7 + $0x58] sm:$0xff] %vm1333, %v1306
  %1346 = vst.msk [vmem:[%s7 + $0x60] sm:$0xff] %vm1333, %v1307
  %1347 = vst.msk [vmem:[%s7 + $0x68] sm:$0xff] %vm1333, %v1308
  %1348 = vst.msk [vmem:[%s7 + $0x70] sm:$0xff] %vm1333, %v1309
  %1349 = vst.msk [vmem:[%s7 + $0x78] sm:$0xff] %vm1333, %v1310
  %1350 = vst.msk [vmem:[%s7 + $0x80] sm:$0xff] %vm1333, %v1311
  %1351 = vst.msk [vmem:[%s7 + $0x88] sm:$0xff] %vm1333, %v1312
  %1352 = vst.msk [vmem:[%s7 + $0x90] sm:$0xff] %vm1333, %v1313
  %1353 = vst.msk [vmem:[%s7 + $0x98] sm:$0xff] %vm1333, %v1314
  %1354 = vst.msk [vmem:[%s7 + $0xa0] sm:$0xff] %vm1333, %v1315
  %1355 = vst.msk [vmem:[%s7 + $0xa8] sm:$0xff] %vm1333, %v1316
  %1356 = vst.msk [vmem:[%s7 + $0xb0] sm:$0xff] %vm1333, %v1317
  %1357 = vst.msk [vmem:[%s7 + $0xb8] sm:$0xff] %vm1333, %v1318
  %1358 = vst.msk [vmem:[%s7 + $0xc0] sm:$0xff] %vm1333, %v1319
  %1359 = vst.msk [vmem:[%s7 + $0xc8] sm:$0xff] %vm1333, %v1320
  %1360 = vst.msk [vmem:[%s7 + $0xd0] sm:$0xff] %vm1333, %v1321
  %1361 = vst.msk [vmem:[%s7 + $0xd8] sm:$0xff] %vm1333, %v1322
  %1362 = vst.msk [vmem:[%s7 + $0xe0] sm:$0xff] %vm1333, %v1323
  %1363 = vst.msk [vmem:[%s7 + $0xe8] sm:$0xff] %vm1333, %v1324
  %1364 = vst.msk [vmem:[%s7 + $0xf0] sm:$0xff] %vm1333, %v1325
  %1365 = vst.msk [vmem:[%s7 + $0xf8] sm:$0xff] %vm1333, %v1326
  %1366 = vst.msk [vmem:[%s7 + $0x100] sm:$0xff] %vm1333, %v1327
  %1367 = vst.msk [vmem:[%s7 + $0x108] sm:$0xff] %vm1333, %v1328
  %1368 = vst.msk [vmem:[%s7 + $0x110] sm:$0xff] %vm1333, %v1329
  %1369 = vst.msk [vmem:[%s7 + $0x118] sm:$0xff] %vm1333, %v1330
  %1370 = vst.msk [vmem:[%s7 + $0x120] sm:$0xff] %vm1333, %v1331
  %1371 = vst.msk [vmem:[%s7 + $0x128] sm:$0xff] %vm1333, %v1332
  // Predicated region
  $region30: #{sim_net_forward.1} parent=0 // pred_check
    _
  $region31: #{sim_net_forward.1} parent=0 // pred_check_branch
    %1373 = sbr.rel (0) target = $region33
  $region32: #{sim_net_forward.1} parent=0 // pred_region
    _
  $region33: #{sim_net_forward.1} parent=0 // pred_fallthru
    _
  // Predicated region
  $region34: #{sim_net_forward.1} parent=0 // pred_check
    _
  $region35: #{sim_net_forward.1} parent=0 // pred_check_branch
    %1375 = sbr.rel (0) target = $region37
  $region36: #{sim_net_forward.1} parent=0 // pred_region
    _
  $region37: #{sim_net_forward.1} parent=0 // pred_fallthru
    _

</llo_original>
